<compile_context>
chip_gen: v6e
topology: v6e:2x2x1
jax: 0.10.0
libtpu: 0.0.40
codegen_flags: <defaults>
</compile_context>

<pallas_src>
import jax
import jax.numpy as jnp
from jax.experimental import pallas as pl
from jax.experimental.pallas import tpu as pltpu


_LANE = 128
# Slabs at/below this run as one un-pipelined whole-array block.  Kept small
# (256 KiB) so 0.5-2 MiB slabs still get a multi-step pipeline.
_SINGLE_BLOCK_BYTES = 256 * 1024
# Minimum grid steps on the pipelined path: >=2 so both v7x TensorCores get
# work, >=4 so each core still overlaps DMA with compute.
_MIN_PIPELINE_STEPS = 4


def _silu_kernel(x_ref, o_ref):
    # func(x) = x * sigmoid(x) (SiLU), with sigmoid(x) = 0.5 * (1 + tanh(x/2)).
    # One EUP transcendental per element (tanh); the extra mul/adds ride the
    # idle VALU slots.  Compute upcasts to f32 in-register; HBM traffic stays
    # in the input dtype.  The kernel is HBM-bound on every generation.
    x = x_ref[...].astype(jnp.float32)
    sig = 0.5 * (jnp.tanh(0.5 * x) + 1.0)
    o_ref[...] = (x * sig).astype(o_ref.dtype)


def _round_up(n: int, m: int) -> int:
    return (n + m - 1) // m * m


def _budgets():
    """Per-generation (target_block_bytes, vmem_limit_bytes)."""
    try:
        cap = int(getattr(pltpu.get_tpu_info(), "vmem_capacity_bytes", 0) or 0)
    except Exception:  # unknown backend / trace environment
        cap = 0
    if cap and cap <= 96 * 1024 * 1024:
        # v7x-class core (64 MiB VMEM, ~3.2 TB/s HBM): bigger blocks amortize
        # the ~0.35 us per-grid-step overhead.
        target = 6 * 1024 * 1024
    else:
        # v5e / v6e (128 MiB physical VMEM) or unknown.
        target = 4 * 1024 * 1024
    # input + output, each double-buffered (4 live block buffers) + headroom.
    vmem_limit = 4 * target + 4 * 1024 * 1024
    return target, vmem_limit


def _cost_estimate(total: int, itemsize: int) -> pl.CostEstimate:
    return pl.CostEstimate(
        flops=4 * total,
        transcendentals=total,
        bytes_accessed=2 * total * itemsize,
    )


def _whole_array_call(x: jax.Array, cost: pl.CostEstimate) -> jax.Array:
    # One block covering the full array (any rank): no grid, no (8, 128)
    # divisibility constraint, no per-step pipeline overhead.
    return pl.pallas_call(
        _silu_kernel,
        out_shape=jax.ShapeDtypeStruct(x.shape, x.dtype),
        cost_estimate=cost,
    )(x)


def _run_2d_slab(x2d, row_unit, target_block_bytes, vmem_limit, cost):
    """SiLU over a lane-dense (n_rows, lanes) slab, pipelined if large."""
    n_rows, lanes = x2d.shape
    itemsize = x2d.dtype.itemsize
    slab_bytes = n_rows * lanes * itemsize
    if slab_bytes <= _SINGLE_BLOCK_BYTES:
        return _whole_array_call(x2d, cost)

    grid_n = max(pl.cdiv(slab_bytes, target_block_bytes), _MIN_PIPELINE_STEPS)
    block_rows = _round_up(pl.cdiv(n_rows, grid_n), row_unit)
    block_rows = min(block_rows, _round_up(n_rows, row_unit))
    grid_n = pl.cdiv(n_rows, block_rows)

    return pl.pallas_call(
        _silu_kernel,
        out_shape=jax.ShapeDtypeStruct((n_rows, lanes), x2d.dtype),
        grid_spec=pltpu.PrefetchScalarGridSpec(
            num_scalar_prefetch=0,
            grid=(grid_n,),
            in_specs=[pl.BlockSpec((block_rows, lanes), lambda i: (i, 0))],
            out_specs=pl.BlockSpec((block_rows, lanes), lambda i: (i, 0)),
        ),
        compiler_params=pltpu.CompilerParams(
            # "parallel" lets the runtime shard this axis across TensorCores on
            # multi-core chips (v7x); the partial last block is masked.
            dimension_semantics=("parallel",),
            vmem_limit_bytes=vmem_limit,
        ),
        cost_estimate=cost,
    )(x2d)


def _run_native_leading_axis(x, target_block_bytes, vmem_limit, cost):
    """SiLU on the native shape, blocking only the leading axis.

    Trailing block dims equal the full array dims, so no (8, 128) divisibility
    rule applies and lane-unaligned shapes need no padding; the partial final
    block along the leading axis is masked by Pallas.
    """
    ndim = x.ndim
    lead = x.shape[0]
    itemsize = x.dtype.itemsize
    per_lead_bytes = (x.size // lead) * itemsize
    bd0 = max(1, min(lead, target_block_bytes // per_lead_bytes))
    if ndim == 2:
        # Here the leading axis is the sublane axis: keep it a multiple of 8
        # (or the full extent).
        bd0 = _round_up(bd0, 8)
        if bd0 >= lead:
            bd0 = lead
    grid_n = pl.cdiv(lead, bd0)
    block_shape = (bd0,) + tuple(x.shape[1:])
    trailing = (0,) * (ndim - 1)

    return pl.pallas_call(
        _silu_kernel,
        out_shape=jax.ShapeDtypeStruct(x.shape, x.dtype),
        grid_spec=pltpu.PrefetchScalarGridSpec(
            num_scalar_prefetch=0,
            grid=(grid_n,),
            in_specs=[pl.BlockSpec(block_shape, lambda i: (i,) + trailing)],
            out_specs=pl.BlockSpec(block_shape, lambda i: (i,) + trailing),
        ),
        compiler_params=pltpu.CompilerParams(
            dimension_semantics=("parallel",),
            vmem_limit_bytes=vmem_limit,
        ),
        cost_estimate=cost,
    )(x)


def _choose_lanes(total: int, row_unit: int) -> int:
    """Widest lane width (multiple of 128) dividing `total` exactly, preferring
    candidates that still leave >= row_unit rows (densely packed vregs)."""
    for cand in (2048, 1024, 512, 256):
        if total % cand == 0 and total // cand >= row_unit:
            return cand
    return _LANE


def lambda_forward(x: jax.Array) -> jax.Array:
    """Applies func(x) = x * sigmoid(x) elementwise via a Pallas TPU kernel."""
    orig_shape = x.shape
    dtype = x.dtype
    total = int(x.size)
    if total == 0:
        return x
    itemsize = dtype.itemsize
    # sublane packing unit: 8 for 4-byte, 16 for bf16, 32 for 1-byte dtypes.
    row_unit = max(8, 32 // itemsize)
    slab_bytes = total * itemsize

    target_block_bytes, vmem_limit = _budgets()
    cost = _cost_estimate(total, itemsize)

    if total % _LANE == 0:
        # Lane-dense slab (free reshape of contiguous data): widest lane width
        # that divides exactly -> dense, unmasked vector stores.
        lanes = _choose_lanes(total, row_unit)
        x2d = x.reshape(total // lanes, lanes)
        out2d = _run_2d_slab(x2d, row_unit, target_block_bytes, vmem_limit, cost)
        return out2d.reshape(orig_shape)

    # Lane-unaligned totals: no pad/slice round trip (that would ~triple HBM
    # traffic for a purely memory-bound op).
    if slab_bytes <= _SINGLE_BLOCK_BYTES:
        x_nd = x if x.ndim >= 2 else x.reshape(1, total)
        out = _whole_array_call(x_nd, cost)
        return out.reshape(orig_shape)

    if x.ndim >= 2:
        per_lead_bytes = (total // x.shape[0]) * itemsize
        if per_lead_bytes <= target_block_bytes:
            return _run_native_leading_axis(x, target_block_bytes, vmem_limit, cost)

    # TODO(synk): degenerate case (huge, lane-unaligned, with a single leading
    # slice that alone exceeds the block budget): one-time pad + slice, which
    # costs extra HBM traffic.  SiLU(0) == 0 so the tail is inert.
    lanes = _LANE
    n_rows = pl.cdiv(total, lanes)
    pad = n_rows * lanes - total
    x2d = jnp.pad(jnp.ravel(x), (0, pad)).reshape(n_rows, lanes)
    out2d = _run_2d_slab(x2d, row_unit, target_block_bytes, vmem_limit, cost)
    return out2d.reshape(-1)[:total].reshape(orig_shape)


class Lambda:
    """JAX/Pallas analogue of the PyTorch Lambda(func) wrapper."""

    def __init__(self, func):
        self.func = func

    def __call__(self, x):
        return self.func(x)


if __name__ == "__main__":
    module = Lambda(lambda_forward)   # Lambda wrapping the Pallas SiLU payload

    key = jax.random.PRNGKey(0)
    # NCHW, small shape consistent with a conv-style pipeline
    x = jax.random.normal(key, (2, 4, 16, 16), dtype=jnp.float32)
    out = jax.block_until_ready(module(x))

    ref = x * jax.nn.sigmoid(x)
    assert out.shape == x.shape and out.dtype == x.dtype
    assert jnp.allclose(out, ref, atol=1e-5, rtol=1e-5), "mismatch vs reference"

    # Exercise the lane-unaligned path (native shape, no pad/slice round trip).
    x_odd = jax.random.normal(jax.random.PRNGKey(1), (3, 7, 11), dtype=jnp.float32)
    out_odd = jax.block_until_ready(module(x_odd))
    ref_odd = x_odd * jax.nn.sigmoid(x_odd)
    assert out_odd.shape == x_odd.shape and out_odd.dtype == x_odd.dtype
    assert jnp.allclose(out_odd, ref_odd, atol=1e-5, rtol=1e-5), "mismatch (unaligned)"

    print("KERNEL_OK")
</pallas_src>

<mosaic_0001>
module attributes {stable_mosaic.version = 11 : i64} {
  func.func @_silu_kernel(%arg0: memref<8x256xf32, #tpu.memory_space<vmem>>, %arg1: memref<8x256xf32, #tpu.memory_space<vmem>>) attributes {dimension_semantics = [], scalar_prefetch = 0 : i64, scratch_operands = 0 : i64, tpu.core_type = #tpu.core_type<tc>} {
    %c0 = arith.constant 0 : index
    %c0_0 = arith.constant 0 : index
    %0 = vector.load %arg0[%c0, %c0_0] : memref<8x256xf32, #tpu.memory_space<vmem>>, vector<8x256xf32>
    %cst = arith.constant 5.000000e-01 : f32
    %1 = vector.broadcast %cst : f32 to vector<8x256xf32>
    %2 = arith.mulf %1, %0 : vector<8x256xf32>
    %3 = math.tanh %2 : vector<8x256xf32>
    %cst_1 = arith.constant 1.000000e+00 : f32
    %4 = vector.broadcast %cst_1 : f32 to vector<8x256xf32>
    %5 = arith.addf %3, %4 : vector<8x256xf32>
    %cst_2 = arith.constant 5.000000e-01 : f32
    %6 = vector.broadcast %cst_2 : f32 to vector<8x256xf32>
    %7 = arith.mulf %6, %5 : vector<8x256xf32>
    %8 = arith.mulf %0, %7 : vector<8x256xf32>
    %c0_3 = arith.constant 0 : index
    %c0_4 = arith.constant 0 : index
    %9 = vector.load %arg1[%c0_3, %c0_4] : memref<8x256xf32, #tpu.memory_space<vmem>>, vector<8x256xf32>
    tpu.vector_store %arg1[%c0_3, %c0_4], %8 {strides = array<i32>} : memref<8x256xf32, #tpu.memory_space<vmem>>, vector<8x256xf32>,
    return
  }
}

</mosaic_0001>

<llo_original>
// kernel: tpu_custom_call.1
$region0: #{tpu_custom_call.1}
  #allocation0 [shape = 'u32[]', space=smem, size = 0x4, offset = 0x4, fixed_abs, tag = 'smem constant byte address 0x4 - core index']
  #allocation1 [shape = 'u32[144,128]{1,0:T(1,128)}', space=vmem, size = 0x12000, scoped, tag = 'internal scratch']
  %s0 = inlined_call_operand.hbm [shape: f32[8,256], index: 0, kind: input, shape index: {}]
  %s1 = inlined_call_operand.hbm [shape: f32[8,256], index: 1, kind: output, shape index: {}]
  %s2 = sld [smem:[#allocation0]]
  $region18: #{tpu_custom_call.1} parent=0
    _
  %s4 = ssub.s32 1, %s2
  %s5 = scalar_select 0, %s4, %s2
  $region1: #{tpu_custom_call.1} parent=0
    #allocation2 [shape = 'u8[8192]{0}', space=vmem, size = 0x2000, scoped, tag = 'input window, operand 0, single buffered']
    #allocation3 [shape = 's32[1]{0}', space=sflag, size = 0x4, scoped, tag = 'scoped memory for tpu_custom_call.1']
    #allocation4 [shape = 's32[1]{0}', space=sflag, size = 0x4, scoped, tag = 'scoped memory for tpu_custom_call.1']
    #allocation5 [shape = 'u8[8192]{0}', space=vmem, size = 0x2000, scoped, tag = 'output window, operand 0, single buffered']
    %6 = vsyncpa [#allocation3], 0
    %7 = vsyncpa [#allocation4], 0
    // Predicated region
    $region2: #{tpu_custom_call.1} parent=1 // pred_check
      _
    $region3: #{tpu_custom_call.1} parent=1 // pred_check_branch
      %9 = sbr.rel (0) target = $region5
    $region4: #{tpu_custom_call.1} parent=1 // pred_region
      %s11 = ssub.s32 256, 256
      %12 = vsyncadd [#allocation3], %s11
      %s14 = sshll.u32 [#allocation2], 4
      %s15 = int_to_ptr.vmem [resolvable:$true] %s14
      %17 = dma.hbm_to_vmem [thread:$0]  %s0, 256, %s15, [#allocation3]
    $region5: #{tpu_custom_call.1} parent=1 // pred_fallthru
      _
    // Predicated region
    $region6: #{tpu_custom_call.1} parent=1 // pred_check
      _
    $region7: #{tpu_custom_call.1} parent=1 // pred_check_branch
      %19 = sbr.rel (0) target = $region9
    $region8: #{tpu_custom_call.1} parent=1 // pred_region
      %20 = dma.done [#allocation3], 256
    $region9: #{tpu_custom_call.1} parent=1 // pred_fallthru
      _
    %v21 = vld [vmem:[#allocation2] sm:$0xff]
    %v22 = vld [vmem:[#allocation2 + $0x8] sm:$0xff]
    %v23 = vmul.f32 %v21, 0.5
    %v24 = vmul.f32 %v22, 0.5
    %v25 = vtanh.pop %v23
    %v26 = vtanh.pop %v24
    %v27 = vadd.f32 %v25, 1.0
    %v28 = vadd.f32 %v26, 1.0
    %v29 = vmul.f32 %v27, 0.5
    %v30 = vmul.f32 %v28, 0.5
    %v31 = vmul.f32 %v21, %v29
    %v32 = vmul.f32 %v22, %v30
    %33 = vst [vmem:[#allocation5] sm:$0xff] %v31
    %34 = vst [vmem:[#allocation5 + $0x8] sm:$0xff] %v32
    // Predicated region
    $region10: #{tpu_custom_call.1} parent=1 // pred_check
      _
    $region11: #{tpu_custom_call.1} parent=1 // pred_check_branch
      %36 = sbr.rel (0) target = $region13
    $region12: #{tpu_custom_call.1} parent=1 // pred_region
      %s38 = ssub.s32 256, 256
      %39 = vsyncadd [#allocation4], %s38
      %s41 = sshll.u32 [#allocation5], 4
      %s42 = int_to_ptr.vmem [resolvable:$true] %s41
      %44 = dma.vmem_to_hbm [thread:$0]  %s42, 256, %s1, [#allocation4]
    $region13: #{tpu_custom_call.1} parent=1 // pred_fallthru
      _
    // Predicated region
    $region14: #{tpu_custom_call.1} parent=1 // pred_check
      _
    $region15: #{tpu_custom_call.1} parent=1 // pred_check_branch
      %46 = sbr.rel (0) target = $region17
    $region16: #{tpu_custom_call.1} parent=1 // pred_region
      %47 = dma.done [#allocation4], 256
    $region17: #{tpu_custom_call.1} parent=1 // pred_fallthru
      _
    %48 = vsyncpa [#allocation3], 1
    %49 = vsyncpa [#allocation4], 1

</llo_original>
